<compile_context>
chip_gen: v7x
topology: tpu7x:2x2x1
jax: 0.10.0
libtpu: 0.0.40
codegen_flags: <defaults>
</compile_context>

<pallas_src>
import jax
import jax.numpy as jnp
from jax import lax
from jax.experimental import pallas as pl

D_IN1 = 12    # matmul1 in_features
D_HID = 33    # matmul1 out_features == matmul2 in_features
D_OUT2 = 33   # matmul2 out_features (adjusted, see TODO above)
P_DROP = 0.2  # F.dropout default is training=True, so dropout IS applied
DROP_THRESHOLD = int(P_DROP * (1 << 32))   # drop iff bits < threshold (uint32)
KEEP_SCALE = 1.0 / (1.0 - P_DROP)          # inverted-dropout rescale


def _sdpa_kernel(x1_ref, x2_ref, w1t_ref, b1_ref, w2t_ref, b2_ref, bits_ref,
                 out_ref):
    # Single program (no grid): all B batches handled with a tiny unrolled loop.
    w1t = w1t_ref[...]          # (12, 33)  pre-transposed
    b1 = b1_ref[...]            # (1, 33)
    w2t = w2t_ref[...]          # (33, 33)  pre-transposed
    b2 = b2_ref[...]            # (1, 33)
    thresh = jnp.uint32(DROP_THRESHOLD)

    B = out_ref.shape[0]
    for b in range(B):          # static unroll; B is tiny
        x1 = x1_ref[b]          # (S1, 12)
        x2 = x2_ref[b]          # (S2, 33)

        # v1 = matmul1(x1); v2 = matmul2(x2)  (no in-kernel weight transpose)
        v1 = jnp.dot(x1, w1t, preferred_element_type=jnp.float32) + b1
        v2 = jnp.dot(x2, w2t, preferred_element_type=jnp.float32) + b2

        # v3/v4 = (v1 @ v2^T) / 10 : contract last dims directly (no v2.T materialized)
        s = lax.dot_general(v1, v2, (((1,), (1,)), ((), ())),
                            preferred_element_type=jnp.float32) * 0.1

        # v5 = softmax(dim=-1); fold dropout's 1/(1-p) into the normalization multiply
        m = jnp.max(s, axis=-1, keepdims=True)
        e = jnp.exp(s - m)
        denom = jnp.sum(e, axis=-1, keepdims=True)
        inv = (1.0 / denom) * KEEP_SCALE          # (S1, 1)

        # v6 = dropout(v5, p=0.2): integer threshold compare on precomputed bits
        keep = bits_ref[b] >= thresh              # (S1, S2) bool
        p_drop = jnp.where(keep, e, 0.0) * inv

        # v7 = v6 @ v2
        out_ref[b] = jnp.dot(p_drop, v2,
                             preferred_element_type=jnp.float32).astype(out_ref.dtype)


@jax.jit
def sdpa_model(x1, x2, w1, b1, w2, b2, key):
    B, S1, _ = x1.shape
    _, S2, _ = x2.shape

    # Dropout randomness drawn once for the whole (B, S1, S2) tensor.
    bits = jax.random.bits(key, (B, S1, S2), dtype=jnp.uint32)

    # Host-side layout plumbing (free): pre-transpose weights, 2-D biases.
    w1t = jnp.transpose(w1)                 # (12, 33)
    w2t = jnp.transpose(w2)                 # (33, 33)
    b1r = b1.reshape(1, D_HID)
    b2r = b2.reshape(1, D_OUT2)

    # No grid / default full-array BlockSpecs: the entire working set (a few KB)
    # sits in VMEM for a single program, eliminating per-grid-step overhead.
    return pl.pallas_call(
        _sdpa_kernel,
        out_shape=jax.ShapeDtypeStruct((B, S1, D_OUT2), jnp.float32),
    )(x1, x2, w1t, b1r, w2t, b2r, bits)


def init_params(key):
    """Deterministic PyTorch-style (uniform +/- 1/sqrt(fan_in)) init."""
    k1, k2, k3, k4 = jax.random.split(key, 4)
    bnd1 = 1.0 / (D_IN1 ** 0.5)
    bnd2 = 1.0 / (D_HID ** 0.5)
    w1 = jax.random.uniform(k1, (D_HID, D_IN1), jnp.float32, -bnd1, bnd1)
    b1 = jax.random.uniform(k2, (D_HID,), jnp.float32, -bnd1, bnd1)
    w2 = jax.random.uniform(k3, (D_OUT2, D_HID), jnp.float32, -bnd2, bnd2)
    b2 = jax.random.uniform(k4, (D_OUT2,), jnp.float32, -bnd2, bnd2)
    return w1, b1, w2, b2


if __name__ == "__main__":
    key = jax.random.PRNGKey(0)
    kx1, kx2, kp, kd = jax.random.split(key, 4)

    B, S1, S2 = 2, 8, 8
    x1 = jax.random.normal(kx1, (B, S1, D_IN1), jnp.float32)
    x2 = jax.random.normal(kx2, (B, S2, D_HID), jnp.float32)
    w1, b1, w2, b2 = init_params(kp)

    out = sdpa_model(x1, x2, w1, b1, w2, b2, kd)
    jax.block_until_ready(out)
    assert out.shape == (B, S1, D_OUT2), out.shape
    assert bool(jnp.all(jnp.isfinite(out)))
    print("KERNEL_OK")
</pallas_src>

<mosaic_0001>
module attributes {stable_mosaic.version = 11 : i64} {
  func.func @_sdpa_kernel(%arg0: memref<2x8x12xf32, #tpu.memory_space<vmem>>, %arg1: memref<2x8x33xf32, #tpu.memory_space<vmem>>, %arg2: memref<12x33xf32, #tpu.memory_space<vmem>>, %arg3: memref<1x33xf32, #tpu.memory_space<vmem>>, %arg4: memref<33x33xf32, #tpu.memory_space<vmem>>, %arg5: memref<1x33xf32, #tpu.memory_space<vmem>>, %arg6: memref<2x8x8xi32, #tpu.memory_space<vmem>>, %arg7: memref<2x8x33xf32, #tpu.memory_space<vmem>>) attributes {dimension_semantics = [], scalar_prefetch = 0 : i64, scratch_operands = 0 : i64, tpu.core_type = #tpu.core_type<tc>} {
    %c0 = arith.constant 0 : index
    %c0_0 = arith.constant 0 : index
    %0 = vector.load %arg2[%c0, %c0_0] : memref<12x33xf32, #tpu.memory_space<vmem>>, vector<12x33xf32>
    %c0_1 = arith.constant 0 : index
    %c0_2 = arith.constant 0 : index
    %1 = vector.load %arg3[%c0_1, %c0_2] : memref<1x33xf32, #tpu.memory_space<vmem>>, vector<1x33xf32>
    %c0_3 = arith.constant 0 : index
    %c0_4 = arith.constant 0 : index
    %2 = vector.load %arg4[%c0_3, %c0_4] : memref<33x33xf32, #tpu.memory_space<vmem>>, vector<33x33xf32>
    %c0_5 = arith.constant 0 : index
    %c0_6 = arith.constant 0 : index
    %3 = vector.load %arg5[%c0_5, %c0_6] : memref<1x33xf32, #tpu.memory_space<vmem>>, vector<1x33xf32>
    %c0_7 = arith.constant 0 : index
    %c0_8 = arith.constant 0 : index
    %c0_9 = arith.constant 0 : index
    %4 = vector.load %arg0[%c0_7, %c0_8, %c0_9] : memref<2x8x12xf32, #tpu.memory_space<vmem>>, vector<1x8x12xf32>
    %5 = vector.shape_cast %4 : vector<1x8x12xf32> to vector<8x12xf32>
    %c0_10 = arith.constant 0 : index
    %c0_11 = arith.constant 0 : index
    %c0_12 = arith.constant 0 : index
    %6 = vector.load %arg1[%c0_10, %c0_11, %c0_12] : memref<2x8x33xf32, #tpu.memory_space<vmem>>, vector<1x8x33xf32>
    %7 = vector.shape_cast %6 : vector<1x8x33xf32> to vector<8x33xf32>
    %cst = arith.constant dense<0.000000e+00> : vector<8x33xf32>
    %8 = tpu.matmul %5, %0, %cst {dimension_numbers = #tpu.dot_dimension_numbers<[1], [0], [0], [1], [0, 0, 1, 1], [], []>} : vector<8x12xf32>, vector<12x33xf32>, vector<8x33xf32> -> vector<8x33xf32>
    %9 = vector.broadcast %1 : vector<1x33xf32> to vector<8x33xf32>
    %10 = arith.addf %8, %9 : vector<8x33xf32>
    %cst_13 = arith.constant dense<0.000000e+00> : vector<8x33xf32>
    %11 = tpu.matmul %7, %2, %cst_13 {dimension_numbers = #tpu.dot_dimension_numbers<[1], [0], [0], [1], [0, 0, 1, 1], [], []>} : vector<8x33xf32>, vector<33x33xf32>, vector<8x33xf32> -> vector<8x33xf32>
    %12 = vector.broadcast %3 : vector<1x33xf32> to vector<8x33xf32>
    %13 = arith.addf %11, %12 : vector<8x33xf32>
    %cst_14 = arith.constant dense<0.000000e+00> : vector<8x8xf32>
    %14 = tpu.matmul %10, %13, %cst_14 {dimension_numbers = #tpu.dot_dimension_numbers<[1], [1], [0], [0], [0, 0, 1, 0], [], []>} : vector<8x33xf32>, vector<8x33xf32>, vector<8x8xf32> -> vector<8x8xf32>
    %cst_15 = arith.constant 1.000000e-01 : f32
    %15 = vector.broadcast %cst_15 : f32 to vector<8x8xf32>
    %16 = arith.mulf %14, %15 : vector<8x8xf32>
    %cst_16 = arith.constant dense<0xFF800000> : vector<8xf32>
    %17 = vector.multi_reduction <maximumf>, %16, %cst_16 [1] : vector<8x8xf32> to vector<8xf32>
    %18 = vector.shape_cast %17 : vector<8xf32> to vector<8x1xf32>
    %19 = vector.broadcast %18 : vector<8x1xf32> to vector<8x8xf32>
    %20 = arith.subf %16, %19 : vector<8x8xf32>
    %21 = math.exp %20 : vector<8x8xf32>
    %cst_17 = arith.constant dense<0.000000e+00> : vector<8xf32>
    %22 = vector.multi_reduction <add>, %21, %cst_17 [1] : vector<8x8xf32> to vector<8xf32>
    %23 = vector.shape_cast %22 : vector<8xf32> to vector<8x1xf32>
    %cst_18 = arith.constant 1.000000e+00 : f32
    %24 = vector.broadcast %cst_18 : f32 to vector<8x1xf32>
    %25 = arith.divf %24, %23 : vector<8x1xf32>
    %cst_19 = arith.constant 1.250000e+00 : f32
    %26 = vector.broadcast %cst_19 : f32 to vector<8x1xf32>
    %27 = arith.mulf %25, %26 : vector<8x1xf32>
    %c0_20 = arith.constant 0 : index
    %c0_21 = arith.constant 0 : index
    %c0_22 = arith.constant 0 : index
    %28 = vector.load %arg6[%c0_20, %c0_21, %c0_22] : memref<2x8x8xi32, #tpu.memory_space<vmem>>, vector<1x8x8xi32>
    %29 = vector.shape_cast %28 : vector<1x8x8xi32> to vector<8x8xi32>
    %c858993459_i32 = arith.constant 858993459 : i32
    %30 = vector.broadcast %c858993459_i32 : i32 to vector<8x8xi32>
    %31 = arith.cmpi uge, %29, %30 : vector<8x8xi32>
    %cst_23 = arith.constant 0.000000e+00 : f32
    %32 = vector.broadcast %cst_23 : f32 to vector<8x8xf32>
    %33 = arith.select %31, %21, %32 : vector<8x8xi1>, vector<8x8xf32>
    %34 = vector.broadcast %27 : vector<8x1xf32> to vector<8x8xf32>
    %35 = arith.mulf %33, %34 : vector<8x8xf32>
    %cst_24 = arith.constant dense<0.000000e+00> : vector<8x33xf32>
    %36 = tpu.matmul %35, %13, %cst_24 {dimension_numbers = #tpu.dot_dimension_numbers<[1], [0], [0], [1], [0, 0, 1, 1], [], []>} : vector<8x8xf32>, vector<8x33xf32>, vector<8x33xf32> -> vector<8x33xf32>
    %c0_25 = arith.constant 0 : index
    %c0_26 = arith.constant 0 : index
    %c0_27 = arith.constant 0 : index
    %37 = vector.load %arg7[%c0_25, %c0_26, %c0_27] : memref<2x8x33xf32, #tpu.memory_space<vmem>>, vector<1x8x33xf32>
    %38 = vector.shape_cast %37 : vector<1x8x33xf32> to vector<8x33xf32>
    %39 = vector.shape_cast %36 : vector<8x33xf32> to vector<1x8x33xf32>
    tpu.vector_store %arg7[%c0_25, %c0_26, %c0_27], %39 {strides = array<i32>} : memref<2x8x33xf32, #tpu.memory_space<vmem>>, vector<1x8x33xf32>,
    %c1 = arith.constant 1 : index
    %c0_28 = arith.constant 0 : index
    %c0_29 = arith.constant 0 : index
    %40 = vector.load %arg0[%c1, %c0_28, %c0_29] : memref<2x8x12xf32, #tpu.memory_space<vmem>>, vector<1x8x12xf32>
    %41 = vector.shape_cast %40 : vector<1x8x12xf32> to vector<8x12xf32>
    %c1_30 = arith.constant 1 : index
    %c0_31 = arith.constant 0 : index
    %c0_32 = arith.constant 0 : index
    %42 = vector.load %arg1[%c1_30, %c0_31, %c0_32] : memref<2x8x33xf32, #tpu.memory_space<vmem>>, vector<1x8x33xf32>
    %43 = vector.shape_cast %42 : vector<1x8x33xf32> to vector<8x33xf32>
    %cst_33 = arith.constant dense<0.000000e+00> : vector<8x33xf32>
    %44 = tpu.matmul %41, %0, %cst_33 {dimension_numbers = #tpu.dot_dimension_numbers<[1], [0], [0], [1], [0, 0, 1, 1], [], []>} : vector<8x12xf32>, vector<12x33xf32>, vector<8x33xf32> -> vector<8x33xf32>
    %45 = vector.broadcast %1 : vector<1x33xf32> to vector<8x33xf32>
    %46 = arith.addf %44, %45 : vector<8x33xf32>
    %cst_34 = arith.constant dense<0.000000e+00> : vector<8x33xf32>
    %47 = tpu.matmul %43, %2, %cst_34 {dimension_numbers = #tpu.dot_dimension_numbers<[1], [0], [0], [1], [0, 0, 1, 1], [], []>} : vector<8x33xf32>, vector<33x33xf32>, vector<8x33xf32> -> vector<8x33xf32>
    %48 = vector.broadcast %3 : vector<1x33xf32> to vector<8x33xf32>
    %49 = arith.addf %47, %48 : vector<8x33xf32>
    %cst_35 = arith.constant dense<0.000000e+00> : vector<8x8xf32>
    %50 = tpu.matmul %46, %49, %cst_35 {dimension_numbers = #tpu.dot_dimension_numbers<[1], [1], [0], [0], [0, 0, 1, 0], [], []>} : vector<8x33xf32>, vector<8x33xf32>, vector<8x8xf32> -> vector<8x8xf32>
    %cst_36 = arith.constant 1.000000e-01 : f32
    %51 = vector.broadcast %cst_36 : f32 to vector<8x8xf32>
    %52 = arith.mulf %50, %51 : vector<8x8xf32>
    %cst_37 = arith.constant dense<0xFF800000> : vector<8xf32>
    %53 = vector.multi_reduction <maximumf>, %52, %cst_37 [1] : vector<8x8xf32> to vector<8xf32>
    %54 = vector.shape_cast %53 : vector<8xf32> to vector<8x1xf32>
    %55 = vector.broadcast %54 : vector<8x1xf32> to vector<8x8xf32>
    %56 = arith.subf %52, %55 : vector<8x8xf32>
    %57 = math.exp %56 : vector<8x8xf32>
    %cst_38 = arith.constant dense<0.000000e+00> : vector<8xf32>
    %58 = vector.multi_reduction <add>, %57, %cst_38 [1] : vector<8x8xf32> to vector<8xf32>
    %59 = vector.shape_cast %58 : vector<8xf32> to vector<8x1xf32>
    %cst_39 = arith.constant 1.000000e+00 : f32
    %60 = vector.broadcast %cst_39 : f32 to vector<8x1xf32>
    %61 = arith.divf %60, %59 : vector<8x1xf32>
    %cst_40 = arith.constant 1.250000e+00 : f32
    %62 = vector.broadcast %cst_40 : f32 to vector<8x1xf32>
    %63 = arith.mulf %61, %62 : vector<8x1xf32>
    %c1_41 = arith.constant 1 : index
    %c0_42 = arith.constant 0 : index
    %c0_43 = arith.constant 0 : index
    %64 = vector.load %arg6[%c1_41, %c0_42, %c0_43] : memref<2x8x8xi32, #tpu.memory_space<vmem>>, vector<1x8x8xi32>
    %65 = vector.shape_cast %64 : vector<1x8x8xi32> to vector<8x8xi32>
    %c858993459_i32_44 = arith.constant 858993459 : i32
    %66 = vector.broadcast %c858993459_i32_44 : i32 to vector<8x8xi32>
    %67 = arith.cmpi uge, %65, %66 : vector<8x8xi32>
    %cst_45 = arith.constant 0.000000e+00 : f32
    %68 = vector.broadcast %cst_45 : f32 to vector<8x8xf32>
    %69 = arith.select %67, %57, %68 : vector<8x8xi1>, vector<8x8xf32>
    %70 = vector.broadcast %63 : vector<8x1xf32> to vector<8x8xf32>
    %71 = arith.mulf %69, %70 : vector<8x8xf32>
    %cst_46 = arith.constant dense<0.000000e+00> : vector<8x33xf32>
    %72 = tpu.matmul %71, %49, %cst_46 {dimension_numbers = #tpu.dot_dimension_numbers<[1], [0], [0], [1], [0, 0, 1, 1], [], []>} : vector<8x8xf32>, vector<8x33xf32>, vector<8x33xf32> -> vector<8x33xf32>
    %c1_47 = arith.constant 1 : index
    %c0_48 = arith.constant 0 : index
    %c0_49 = arith.constant 0 : index
    %73 = vector.load %arg7[%c1_47, %c0_48, %c0_49] : memref<2x8x33xf32, #tpu.memory_space<vmem>>, vector<1x8x33xf32>
    %74 = vector.shape_cast %73 : vector<1x8x33xf32> to vector<8x33xf32>
    %75 = vector.shape_cast %72 : vector<8x33xf32> to vector<1x8x33xf32>
    tpu.vector_store %arg7[%c1_47, %c0_48, %c0_49], %75 {strides = array<i32>} : memref<2x8x33xf32, #tpu.memory_space<vmem>>, vector<1x8x33xf32>,
    return
  }
}

</mosaic_0001>

<llo_original>
// kernel: sdpa_model.1
$region0: #{sdpa_model.1}
  #allocation0 [shape = 'u32[]', space=smem, size = 0x4, offset = 0x4, fixed_abs, tag = 'smem constant byte address 0x4 - core index']
  #allocation1 [shape = 'u32[144,128]{1,0:T(1,128)}', space=vmem, size = 0x12000, scoped, tag = 'internal scratch']
  %s0 = inlined_call_operand.vmem [shape: f32[2,8,12], index: 0, kind: input, shape index: {}]
  %s1 = inlined_call_operand.vmem [shape: f32[2,8,33], index: 1, kind: input, shape index: {}]
  %s2 = inlined_call_operand.vmem [shape: f32[12,33], index: 2, kind: input, shape index: {}]
  %s3 = inlined_call_operand.vmem [shape: f32[1,33], index: 3, kind: input, shape index: {}]
  %s4 = inlined_call_operand.vmem [shape: f32[33,33], index: 4, kind: input, shape index: {}]
  %s5 = inlined_call_operand.vmem [shape: f32[1,33], index: 5, kind: input, shape index: {}]
  %s6 = inlined_call_operand.vmem [shape: u32[2,8,8], index: 6, kind: input, shape index: {}]
  %s7 = inlined_call_operand.hbm [shape: f32[2,8,33], index: 7, kind: output, shape index: {}]
  %s8 = sld [smem:[#allocation0]]
  $region38: #{sdpa_model.1} parent=0
    _
  %s10 = ssub.s32 1, %s8
  %s11 = scalar_select 0, %s10, %s8
  $region1: #{sdpa_model.1} parent=0
    #allocation2 [shape = 'u8[8192]{0}', space=vmem, size = 0x2000, scoped, tag = 'output window, operand 0, single buffered']
    #allocation3 [shape = 's32[1]{0}', space=sflag, size = 0x4, scoped, tag = 'scoped memory for sdpa_model.1']
    %12 = vsyncpa [#allocation3], 0
    // Predicated region
    $region2: #{sdpa_model.1} parent=1 // pred_check
      _
    $region3: #{sdpa_model.1} parent=1 // pred_check_branch
      %14 = sbr.rel (0) target = $region5
    $region4: #{sdpa_model.1} parent=1 // pred_region
      _
    $region5: #{sdpa_model.1} parent=1 // pred_fallthru
      _
    // Predicated region
    $region6: #{sdpa_model.1} parent=1 // pred_check
      _
    $region7: #{sdpa_model.1} parent=1 // pred_check_branch
      %16 = sbr.rel (0) target = $region9
    $region8: #{sdpa_model.1} parent=1 // pred_region
      _
    $region9: #{sdpa_model.1} parent=1 // pred_fallthru
      _
    // Predicated region
    $region10: #{sdpa_model.1} parent=1 // pred_check
      _
    $region11: #{sdpa_model.1} parent=1 // pred_check_branch
      %18 = sbr.rel (0) target = $region13
    $region12: #{sdpa_model.1} parent=1 // pred_region
      _
    $region13: #{sdpa_model.1} parent=1 // pred_fallthru
      _
    // Predicated region
    $region14: #{sdpa_model.1} parent=1 // pred_check
      _
    $region15: #{sdpa_model.1} parent=1 // pred_check_branch
      %20 = sbr.rel (0) target = $region17
    $region16: #{sdpa_model.1} parent=1 // pred_region
      _
    $region17: #{sdpa_model.1} parent=1 // pred_fallthru
      _
    // Predicated region
    $region18: #{sdpa_model.1} parent=1 // pred_check
      _
    $region19: #{sdpa_model.1} parent=1 // pred_check_branch
      %22 = sbr.rel (0) target = $region21
    $region20: #{sdpa_model.1} parent=1 // pred_region
      _
    $region21: #{sdpa_model.1} parent=1 // pred_fallthru
      _
    // Predicated region
    $region22: #{sdpa_model.1} parent=1 // pred_check
      _
    $region23: #{sdpa_model.1} parent=1 // pred_check_branch
      %24 = sbr.rel (0) target = $region25
    $region24: #{sdpa_model.1} parent=1 // pred_region
      _
    $region25: #{sdpa_model.1} parent=1 // pred_fallthru
      _
    // Predicated region
    $region26: #{sdpa_model.1} parent=1 // pred_check
      _
    $region27: #{sdpa_model.1} parent=1 // pred_check_branch
      %26 = sbr.rel (0) target = $region29
    $region28: #{sdpa_model.1} parent=1 // pred_region
      _
    $region29: #{sdpa_model.1} parent=1 // pred_fallthru
      _
    %v27 = vld [vmem:[%s2] sm:$0xff]
    %v28 = vld [vmem:[%s2 + $0x8] sm:$0xf]
    %v29 = vld [vmem:[%s3] sm:$0x1]
    %v30 = vld [vmem:[%s4] sm:$0xff]
    %v31 = vld [vmem:[%s4 + $0x8] sm:$0xff]
    %v32 = vld [vmem:[%s4 + $0x10] sm:$0xff]
    %v33 = vld [vmem:[%s4 + $0x18] sm:$0xff]
    %v34 = vld [vmem:[%s4 + $0x20] sm:$0x1]
    %v35 = vld [vmem:[%s5] sm:$0x1]
    %v36 = vld [vmem:[%s0] sm:$0xff]
    %v37 = vld [vmem:[%s1] sm:$0xff]
    %v39 = vlaneseq
    %v40 = vshrl.u32 %v39, 7
    %v41 = vsub.s32 0, %v40
    %v42 = vrot.slane %v29, %v41
    %vm44 = vcmask 97280
    %v46 = vsel %vm44, %v36, 0
    %vm48 = vcmask 1043456
    %v50 = vsel %vm48, %v28, 0
    %52 = vmatprep.subr.mxu0 0.0
    %53 = vmatpush1.msra.mxu0 %v27
    %54 = vmatprep.subr.mxu0 0.0
    %55 = vmatpush1.msra.mxu0 %v50
    %56 = vmatprep.subr.mxu0 0.0
    %57 = vmatpush1.msra.mxu0 0.0
    %58 = vmatprep.subr.mxu0 0.0
    %59 = vmatpush1.msra.mxu0 0.0
    %60 = vmatprep.subr.mxu0 0.0
    %61 = vmatpush1.msra.mxu0 0.0
    %62 = vmatprep.subr.mxu0 0.0
    %63 = vmatpush1.msra.mxu0 0.0
    %64 = vmatprep.subr.mxu0 0.0
    %65 = vmatpush1.msra.mxu0 0.0
    %66 = vmatprep.subr.mxu0 0.0
    %67 = vmatpush1.msra.mxu0 0.0
    %68 = vmatprep.subr.mxu0 0.0
    %69 = vmatpush1.msra.mxu0 0.0
    %70 = vmatprep.subr.mxu0 0.0
    %71 = vmatpush1.msra.mxu0 0.0
    %72 = vmatprep.subr.mxu0 0.0
    %73 = vmatpush1.msra.mxu0 0.0
    %74 = vmatprep.subr.mxu0 0.0
    %75 = vmatpush1.msra.mxu0 0.0
    %76 = vmatprep.subr.mxu0 0.0
    %77 = vmatpush1.msra.mxu0 0.0
    %78 = vmatprep.subr.mxu0 0.0
    %79 = vmatpush1.msra.mxu0 0.0
    %80 = vmatprep.subr.mxu0 0.0
    %81 = vmatpush1.msra.mxu0 0.0
    %82 = vmatprep.subr.mxu0 0.0
    %83 = vmatpush1.msra.mxu0 0.0
    %84 = vmatprep.subr.mxu0 0.0
    %85 = vmatpush1.msra.mxu0 0.0
    %86 = vmatprep.subr.mxu0 0.0
    %87 = vmatpush1.msra.mxu0 0.0
    %88 = vmatprep.subr.mxu0 0.0
    %89 = vmatpush1.msra.mxu0 0.0
    %90 = vmatprep.subr.mxu0 0.0
    %91 = vmatpush1.msra.mxu0 0.0
    %92 = vmatprep.subr.mxu0 0.0
    %93 = vmatpush1.msra.mxu0 0.0
    %94 = vmatprep.subr.mxu0 0.0
    %95 = vmatpush1.msra.mxu0 0.0
    %96 = vmatprep.subr.mxu0 0.0
    %97 = vmatpush1.msra.mxu0 0.0
    %98 = vmatprep.subr.mxu0 0.0
    %99 = vmatpush1.msra.mxu0 0.0
    %100 = vmatprep.subr.mxu0 0.0
    %101 = vmatpush1.msra.mxu0 0.0
    %102 = vmatprep.subr.mxu0 0.0
    %103 = vmatpush1.msra.mxu0 0.0
    %104 = vmatprep.subr.mxu0 0.0
    %105 = vmatpush1.msra.mxu0 0.0
    %106 = vmatprep.subr.mxu0 0.0
    %107 = vmatpush1.msra.mxu0 0.0
    %108 = vmatprep.subr.mxu0 0.0
    %109 = vmatpush1.msra.mxu0 0.0
    %110 = vmatprep.subr.mxu0 0.0
    %111 = vmatpush1.msra.mxu0 0.0
    %112 = vmatprep.subr.mxu0 0.0
    %113 = vmatpush1.msra.mxu0 0.0
    %114 = vmatprep.subr.mxu0 0.0
    %115 = vmatpush1.msra.mxu0 0.0
    %116 = vmatprep.mubr.f32.mxu0 0.0
    %117 = vmatmul.mubr.f32.gmra.mrb[0].mxu0 %v46
    %v118 = vpop.f32.mrb[0].mxu0
    %v119 = vadd.f32 %v42, %v118
    %v120 = vpop.f32.mrb[0].mxu0
    %121 = vdwg.mxu0
    %v123 = vlaneseq
    %v124 = vshrl.u32 %v123, 7
    %v125 = vsub.s32 0, %v124
    %v126 = vrot.slane %v35, %v125
    %vm128 = vcmask 269312
    %v130 = vsel %vm128, %v37, 0
    %vm132 = vcmask 1040384
    %v134 = vsel %vm132, %v34, 0
    %136 = vmatprep.subr.mxu0 0.0
    %137 = vmatpush1.msra.mxu0 %v30
    %138 = vmatprep.subr.mxu0 0.0
    %139 = vmatpush1.msra.mxu0 %v31
    %140 = vmatprep.subr.mxu0 0.0
    %141 = vmatpush1.msra.mxu0 %v32
    %142 = vmatprep.subr.mxu0 0.0
    %143 = vmatpush1.msra.mxu0 %v33
    %144 = vmatprep.subr.mxu0 0.0
    %145 = vmatpush1.msra.mxu0 %v134
    %146 = vmatprep.subr.mxu0 0.0
    %147 = vmatpush1.msra.mxu0 0.0
    %148 = vmatprep.subr.mxu0 0.0
    %149 = vmatpush1.msra.mxu0 0.0
    %150 = vmatprep.subr.mxu0 0.0
    %151 = vmatpush1.msra.mxu0 0.0
    %152 = vmatprep.subr.mxu0 0.0
    %153 = vmatpush1.msra.mxu0 0.0
    %154 = vmatprep.subr.mxu0 0.0
    %155 = vmatpush1.msra.mxu0 0.0
    %156 = vmatprep.subr.mxu0 0.0
    %157 = vmatpush1.msra.mxu0 0.0
    %158 = vmatprep.subr.mxu0 0.0
    %159 = vmatpush1.msra.mxu0 0.0
    %160 = vmatprep.subr.mxu0 0.0
    %161 = vmatpush1.msra.mxu0 0.0
    %162 = vmatprep.subr.mxu0 0.0
    %163 = vmatpush1.msra.mxu0 0.0
    %164 = vmatprep.subr.mxu0 0.0
    %165 = vmatpush1.msra.mxu0 0.0
    %166 = vmatprep.subr.mxu0 0.0
    %167 = vmatpush1.msra.mxu0 0.0
    %168 = vmatprep.subr.mxu0 0.0
    %169 = vmatpush1.msra.mxu0 0.0
    %170 = vmatprep.subr.mxu0 0.0
    %171 = vmatpush1.msra.mxu0 0.0
    %172 = vmatprep.subr.mxu0 0.0
    %173 = vmatpush1.msra.mxu0 0.0
    %174 = vmatprep.subr.mxu0 0.0
    %175 = vmatpush1.msra.mxu0 0.0
    %176 = vmatprep.subr.mxu0 0.0
    %177 = vmatpush1.msra.mxu0 0.0
    %178 = vmatprep.subr.mxu0 0.0
    %179 = vmatpush1.msra.mxu0 0.0
    %180 = vmatprep.subr.mxu0 0.0
    %181 = vmatpush1.msra.mxu0 0.0
    %182 = vmatprep.subr.mxu0 0.0
    %183 = vmatpush1.msra.mxu0 0.0
    %184 = vmatprep.subr.mxu0 0.0
    %185 = vmatpush1.msra.mxu0 0.0
    %186 = vmatprep.subr.mxu0 0.0
    %187 = vmatpush1.msra.mxu0 0.0
    %188 = vmatprep.subr.mxu0 0.0
    %189 = vmatpush1.msra.mxu0 0.0
    %190 = vmatprep.subr.mxu0 0.0
    %191 = vmatpush1.msra.mxu0 0.0
    %192 = vmatprep.subr.mxu0 0.0
    %193 = vmatpush1.msra.mxu0 0.0
    %194 = vmatprep.subr.mxu0 0.0
    %195 = vmatpush1.msra.mxu0 0.0
    %196 = vmatprep.subr.mxu0 0.0
    %197 = vmatpush1.msra.mxu0 0.0
    %198 = vmatprep.subr.mxu0 0.0
    %199 = vmatpush1.msra.mxu0 0.0
    %200 = vmatprep.mubr.f32.mxu0 0.0
    %201 = vmatmul.mubr.f32.gmra.mrb[0].mxu0 %v130
    %v202 = vpop.f32.mrb[0].mxu0
    %v203 = vadd.f32 %v126, %v202
    %v204 = vpop.f32.mrb[0].mxu0
    %205 = vdwg.mxu0
    %v207 = vsel %vm128, %v119, 0
    %v210 = vsel %vm128, %v203, 0
    %212 = vmatprep.subr.mxu0 0.0
    %213 = vmatpush1.xpose.msra.mxu0 %v210
    %214 = vmatprep.subr.mxu0 0.0
    %215 = vmatpush1.xpose.msra.mxu0 0.0
    %216 = vmatprep.subr.mxu0 0.0
    %217 = vmatpush1.xpose.msra.mxu0 0.0
    %218 = vmatprep.subr.mxu0 0.0
    %219 = vmatpush1.xpose.msra.mxu0 0.0
    %220 = vmatprep.subr.mxu0 0.0
    %221 = vmatpush1.xpose.msra.mxu0 0.0
    %222 = vmatprep.subr.mxu0 0.0
    %223 = vmatpush1.xpose.msra.mxu0 0.0
    %224 = vmatprep.subr.mxu0 0.0
    %225 = vmatpush1.xpose.msra.mxu0 0.0
    %226 = vmatprep.subr.mxu0 0.0
    %227 = vmatpush1.xpose.msra.mxu0 0.0
    %228 = vmatprep.subr.mxu0 0.0
    %229 = vmatpush1.xpose.msra.mxu0 0.0
    %230 = vmatprep.subr.mxu0 0.0
    %231 = vmatpush1.xpose.msra.mxu0 0.0
    %232 = vmatprep.subr.mxu0 0.0
    %233 = vmatpush1.xpose.msra.mxu0 0.0
    %234 = vmatprep.subr.mxu0 0.0
    %235 = vmatpush1.xpose.msra.mxu0 0.0
    %236 = vmatprep.subr.mxu0 0.0
    %237 = vmatpush1.xpose.msra.mxu0 0.0
    %238 = vmatprep.subr.mxu0 0.0
    %239 = vmatpush1.xpose.msra.mxu0 0.0
    %240 = vmatprep.subr.mxu0 0.0
    %241 = vmatpush1.xpose.msra.mxu0 0.0
    %242 = vmatprep.subr.mxu0 0.0
    %243 = vmatpush1.xpose.msra.mxu0 0.0
    %244 = vmatprep.subr.mxu0 0.0
    %245 = vmatpush1.xpose.msra.mxu0 0.0
    %246 = vmatprep.subr.mxu0 0.0
    %247 = vmatpush1.xpose.msra.mxu0 0.0
    %248 = vmatprep.subr.mxu0 0.0
    %249 = vmatpush1.xpose.msra.mxu0 0.0
    %250 = vmatprep.subr.mxu0 0.0
    %251 = vmatpush1.xpose.msra.mxu0 0.0
    %252 = vmatprep.subr.mxu0 0.0
    %253 = vmatpush1.xpose.msra.mxu0 0.0
    %254 = vmatprep.subr.mxu0 0.0
    %255 = vmatpush1.xpose.msra.mxu0 0.0
    %256 = vmatprep.subr.mxu0 0.0
    %257 = vmatpush1.xpose.msra.mxu0 0.0
    %258 = vmatprep.subr.mxu0 0.0
    %259 = vmatpush1.xpose.msra.mxu0 0.0
    %260 = vmatprep.subr.mxu0 0.0
    %261 = vmatpush1.xpose.msra.mxu0 0.0
    %262 = vmatprep.subr.mxu0 0.0
    %263 = vmatpush1.xpose.msra.mxu0 0.0
    %264 = vmatprep.subr.mxu0 0.0
    %265 = vmatpush1.xpose.msra.mxu0 0.0
    %266 = vmatprep.subr.mxu0 0.0
    %267 = vmatpush1.xpose.msra.mxu0 0.0
    %268 = vmatprep.subr.mxu0 0.0
    %269 = vmatpush1.xpose.msra.mxu0 0.0
    %270 = vmatprep.subr.mxu0 0.0
    %271 = vmatpush1.xpose.msra.mxu0 0.0
    %272 = vmatprep.subr.mxu0 0.0
    %273 = vmatpush1.xpose.msra.mxu0 0.0
    %274 = vmatprep.subr.mxu0 0.0
    %275 = vmatpush1.xpose.msra.mxu0 0.0
    %276 = vmatprep.mubr.f32.mxu0 0.0
    %277 = vmatmul.mubr.f32.gmra.mrb[0].mxu0 %v207
    %v278 = vpop.f32.mrb[0].mxu0
    %v279 = vadd.f32 0.0, %v278
    %v280 = vpop.f32.mrb[0].mxu0
    %281 = vdwg.mxu0
    %v282 = vmul.f32 %v279, 0.1
    %vm283 = vcmask 64512
    %v284 = vsel %vm283, %v282, -inf
    %285 = vmax.xlane.f32.xlu0 %v284
    %v286 = vpop.xlane.xlu0 %285
    %v287 = vsub.f32 %v282, %v286
    %v288 = vmul.f32 %v287, 1.442695
    %v289 = vpow.pop %v288
    %v290 = vsel %vm283, %v289, 0.0
    %291 = vadd.xlane.f32.xlu0 %v290
    %v292 = vpop.xlane.xlu0 %291
    %v293 = vrcp.pop %v292
    %v294 = vmul.f32 1.0, %v293
    %v295 = vmul.f32 %v294, 1.25
    %v296 = vld [vmem:[%s6] sm:$0xff]
    %vm297 = vcmp.ge.u32.totalorder %v296, 858993459
    %v298 = vsel %vm297, %v289, 0.0
    %v299 = vmul.f32 %v298, %v295
    %v301 = vsel %vm283, %v299, 0
    %303 = vmatprep.subr.mxu0 0.0
    %304 = vmatpush1.msra.mxu0 %v203
    %305 = vmatprep.subr.mxu0 0.0
    %306 = vmatpush1.msra.mxu0 0.0
    %307 = vmatprep.subr.mxu0 0.0
    %308 = vmatpush1.msra.mxu0 0.0
    %309 = vmatprep.subr.mxu0 0.0
    %310 = vmatpush1.msra.mxu0 0.0
    %311 = vmatprep.subr.mxu0 0.0
    %312 = vmatpush1.msra.mxu0 0.0
    %313 = vmatprep.subr.mxu0 0.0
    %314 = vmatpush1.msra.mxu0 0.0
    %315 = vmatprep.subr.mxu0 0.0
    %316 = vmatpush1.msra.mxu0 0.0
    %317 = vmatprep.subr.mxu0 0.0
    %318 = vmatpush1.msra.mxu0 0.0
    %319 = vmatprep.subr.mxu0 0.0
    %320 = vmatpush1.msra.mxu0 0.0
    %321 = vmatprep.subr.mxu0 0.0
    %322 = vmatpush1.msra.mxu0 0.0
    %323 = vmatprep.subr.mxu0 0.0
    %324 = vmatpush1.msra.mxu0 0.0
    %325 = vmatprep.subr.mxu0 0.0
    %326 = vmatpush1.msra.mxu0 0.0
    %327 = vmatprep.subr.mxu0 0.0
    %328 = vmatpush1.msra.mxu0 0.0
    %329 = vmatprep.subr.mxu0 0.0
    %330 = vmatpush1.msra.mxu0 0.0
    %331 = vmatprep.subr.mxu0 0.0
    %332 = vmatpush1.msra.mxu0 0.0
    %333 = vmatprep.subr.mxu0 0.0
    %334 = vmatpush1.msra.mxu0 0.0
    %335 = vmatprep.subr.mxu0 0.0
    %336 = vmatpush1.msra.mxu0 0.0
    %337 = vmatprep.subr.mxu0 0.0
    %338 = vmatpush1.msra.mxu0 0.0
    %339 = vmatprep.subr.mxu0 0.0
    %340 = vmatpush1.msra.mxu0 0.0
    %341 = vmatprep.subr.mxu0 0.0
    %342 = vmatpush1.msra.mxu0 0.0
    %343 = vmatprep.subr.mxu0 0.0
    %344 = vmatpush1.msra.mxu0 0.0
    %345 = vmatprep.subr.mxu0 0.0
    %346 = vmatpush1.msra.mxu0 0.0
    %347 = vmatprep.subr.mxu0 0.0
    %348 = vmatpush1.msra.mxu0 0.0
    %349 = vmatprep.subr.mxu0 0.0
    %350 = vmatpush1.msra.mxu0 0.0
    %351 = vmatprep.subr.mxu0 0.0
    %352 = vmatpush1.msra.mxu0 0.0
    %353 = vmatprep.subr.mxu0 0.0
    %354 = vmatpush1.msra.mxu0 0.0
    %355 = vmatprep.subr.mxu0 0.0
    %356 = vmatpush1.msra.mxu0 0.0
    %357 = vmatprep.subr.mxu0 0.0
    %358 = vmatpush1.msra.mxu0 0.0
    %359 = vmatprep.subr.mxu0 0.0
    %360 = vmatpush1.msra.mxu0 0.0
    %361 = vmatprep.subr.mxu0 0.0
    %362 = vmatpush1.msra.mxu0 0.0
    %363 = vmatprep.subr.mxu0 0.0
    %364 = vmatpush1.msra.mxu0 0.0
    %365 = vmatprep.subr.mxu0 0.0
    %366 = vmatpush1.msra.mxu0 0.0
    %367 = vmatprep.mubr.f32.mxu0 0.0
    %368 = vmatmul.mubr.f32.gmra.mrb[0].mxu0 %v301
    %v369 = vpop.f32.mrb[0].mxu0
    %v370 = vadd.f32 0.0, %v369
    %v371 = vpop.f32.mrb[0].mxu0
    %372 = vdwg.mxu0
    %373 = vst.msk [vmem:[#allocation2] sm:$0xff] %vm128, %v370
    %s374 = scalar_lea.vmem %s0, 8
    %v375 = vld [vmem:[%s374] sm:$0xff]
    %s376 = scalar_lea.vmem %s1, 8
    %v377 = vld [vmem:[%s376] sm:$0xff]
    %v379 = vsel %vm44, %v375, 0
    %381 = vmatprep.subr.mxu0 0.0
    %382 = vmatpush1.msra.mxu0 %v27
    %383 = vmatprep.subr.mxu0 0.0
    %384 = vmatpush1.msra.mxu0 %v50
    %385 = vmatprep.subr.mxu0 0.0
    %386 = vmatpush1.msra.mxu0 0.0
    %387 = vmatprep.subr.mxu0 0.0
    %388 = vmatpush1.msra.mxu0 0.0
    %389 = vmatprep.subr.mxu0 0.0
    %390 = vmatpush1.msra.mxu0 0.0
    %391 = vmatprep.subr.mxu0 0.0
    %392 = vmatpush1.msra.mxu0 0.0
    %393 = vmatprep.subr.mxu0 0.0
    %394 = vmatpush1.msra.mxu0 0.0
    %395 = vmatprep.subr.mxu0 0.0
    %396 = vmatpush1.msra.mxu0 0.0
    %397 = vmatprep.subr.mxu0 0.0
    %398 = vmatpush1.msra.mxu0 0.0
    %399 = vmatprep.subr.mxu0 0.0
    %400 = vmatpush1.msra.mxu0 0.0
    %401 = vmatprep.subr.mxu0 0.0
    %402 = vmatpush1.msra.mxu0 0.0
    %403 = vmatprep.subr.mxu0 0.0
    %404 = vmatpush1.msra.mxu0 0.0
    %405 = vmatprep.subr.mxu0 0.0
    %406 = vmatpush1.msra.mxu0 0.0
    %407 = vmatprep.subr.mxu0 0.0
    %408 = vmatpush1.msra.mxu0 0.0
    %409 = vmatprep.subr.mxu0 0.0
    %410 = vmatpush1.msra.mxu0 0.0
    %411 = vmatprep.subr.mxu0 0.0
    %412 = vmatpush1.msra.mxu0 0.0
    %413 = vmatprep.subr.mxu0 0.0
    %414 = vmatpush1.msra.mxu0 0.0
    %415 = vmatprep.subr.mxu0 0.0
    %416 = vmatpush1.msra.mxu0 0.0
    %417 = vmatprep.subr.mxu0 0.0
    %418 = vmatpush1.msra.mxu0 0.0
    %419 = vmatprep.subr.mxu0 0.0
    %420 = vmatpush1.msra.mxu0 0.0
    %421 = vmatprep.subr.mxu0 0.0
    %422 = vmatpush1.msra.mxu0 0.0
    %423 = vmatprep.subr.mxu0 0.0
    %424 = vmatpush1.msra.mxu0 0.0
    %425 = vmatprep.subr.mxu0 0.0
    %426 = vmatpush1.msra.mxu0 0.0
    %427 = vmatprep.subr.mxu0 0.0
    %428 = vmatpush1.msra.mxu0 0.0
    %429 = vmatprep.subr.mxu0 0.0
    %430 = vmatpush1.msra.mxu0 0.0
    %431 = vmatprep.subr.mxu0 0.0
    %432 = vmatpush1.msra.mxu0 0.0
    %433 = vmatprep.subr.mxu0 0.0
    %434 = vmatpush1.msra.mxu0 0.0
    %435 = vmatprep.subr.mxu0 0.0
    %436 = vmatpush1.msra.mxu0 0.0
    %437 = vmatprep.subr.mxu0 0.0
    %438 = vmatpush1.msra.mxu0 0.0
    %439 = vmatprep.subr.mxu0 0.0
    %440 = vmatpush1.msra.mxu0 0.0
    %441 = vmatprep.subr.mxu0 0.0
    %442 = vmatpush1.msra.mxu0 0.0
    %443 = vmatprep.subr.mxu0 0.0
    %444 = vmatpush1.msra.mxu0 0.0
    %445 = vmatprep.mubr.f32.mxu0 0.0
    %446 = vmatmul.mubr.f32.gmra.mrb[0].mxu0 %v379
    %v447 = vpop.f32.mrb[0].mxu0
    %v448 = vadd.f32 %v42, %v447
    %v449 = vpop.f32.mrb[0].mxu0
    %450 = vdwg.mxu0
    %v452 = vsel %vm128, %v377, 0
    %454 = vmatprep.subr.mxu0 0.0
    %455 = vmatpush1.msra.mxu0 %v30
    %456 = vmatprep.subr.mxu0 0.0
    %457 = vmatpush1.msra.mxu0 %v31
    %458 = vmatprep.subr.mxu0 0.0
    %459 = vmatpush1.msra.mxu0 %v32
    %460 = vmatprep.subr.mxu0 0.0
    %461 = vmatpush1.msra.mxu0 %v33
    %462 = vmatprep.subr.mxu0 0.0
    %463 = vmatpush1.msra.mxu0 %v134
    %464 = vmatprep.subr.mxu0 0.0
    %465 = vmatpush1.msra.mxu0 0.0
    %466 = vmatprep.subr.mxu0 0.0
    %467 = vmatpush1.msra.mxu0 0.0
    %468 = vmatprep.subr.mxu0 0.0
    %469 = vmatpush1.msra.mxu0 0.0
    %470 = vmatprep.subr.mxu0 0.0
    %471 = vmatpush1.msra.mxu0 0.0
    %472 = vmatprep.subr.mxu0 0.0
    %473 = vmatpush1.msra.mxu0 0.0
    %474 = vmatprep.subr.mxu0 0.0
    %475 = vmatpush1.msra.mxu0 0.0
    %476 = vmatprep.subr.mxu0 0.0
    %477 = vmatpush1.msra.mxu0 0.0
    %478 = vmatprep.subr.mxu0 0.0
    %479 = vmatpush1.msra.mxu0 0.0
    %480 = vmatprep.subr.mxu0 0.0
    %481 = vmatpush1.msra.mxu0 0.0
    %482 = vmatprep.subr.mxu0 0.0
    %483 = vmatpush1.msra.mxu0 0.0
    %484 = vmatprep.subr.mxu0 0.0
    %485 = vmatpush1.msra.mxu0 0.0
    %486 = vmatprep.subr.mxu0 0.0
    %487 = vmatpush1.msra.mxu0 0.0
    %488 = vmatprep.subr.mxu0 0.0
    %489 = vmatpush1.msra.mxu0 0.0
    %490 = vmatprep.subr.mxu0 0.0
    %491 = vmatpush1.msra.mxu0 0.0
    %492 = vmatprep.subr.mxu0 0.0
    %493 = vmatpush1.msra.mxu0 0.0
    %494 = vmatprep.subr.mxu0 0.0
    %495 = vmatpush1.msra.mxu0 0.0
    %496 = vmatprep.subr.mxu0 0.0
    %497 = vmatpush1.msra.mxu0 0.0
    %498 = vmatprep.subr.mxu0 0.0
    %499 = vmatpush1.msra.mxu0 0.0
    %500 = vmatprep.subr.mxu0 0.0
    %501 = vmatpush1.msra.mxu0 0.0
    %502 = vmatprep.subr.mxu0 0.0
    %503 = vmatpush1.msra.mxu0 0.0
    %504 = vmatprep.subr.mxu0 0.0
    %505 = vmatpush1.msra.mxu0 0.0
    %506 = vmatprep.subr.mxu0 0.0
    %507 = vmatpush1.msra.mxu0 0.0
    %508 = vmatprep.subr.mxu0 0.0
    %509 = vmatpush1.msra.mxu0 0.0
    %510 = vmatprep.subr.mxu0 0.0
    %511 = vmatpush1.msra.mxu0 0.0
    %512 = vmatprep.subr.mxu0 0.0
    %513 = vmatpush1.msra.mxu0 0.0
    %514 = vmatprep.subr.mxu0 0.0
    %515 = vmatpush1.msra.mxu0 0.0
    %516 = vmatprep.subr.mxu0 0.0
    %517 = vmatpush1.msra.mxu0 0.0
    %518 = vmatprep.mubr.f32.mxu0 0.0
    %519 = vmatmul.mubr.f32.gmra.mrb[0].mxu0 %v452
    %v520 = vpop.f32.mrb[0].mxu0
    %v521 = vadd.f32 %v126, %v520
    %v522 = vpop.f32.mrb[0].mxu0
    %523 = vdwg.mxu0
    %v525 = vsel %vm128, %v448, 0
    %v528 = vsel %vm128, %v521, 0
    %530 = vmatprep.subr.mxu0 0.0
    %531 = vmatpush1.xpose.msra.mxu0 %v528
    %532 = vmatprep.subr.mxu0 0.0
    %533 = vmatpush1.xpose.msra.mxu0 0.0
    %534 = vmatprep.subr.mxu0 0.0
    %535 = vmatpush1.xpose.msra.mxu0 0.0
    %536 = vmatprep.subr.mxu0 0.0
    %537 = vmatpush1.xpose.msra.mxu0 0.0
    %538 = vmatprep.subr.mxu0 0.0
    %539 = vmatpush1.xpose.msra.mxu0 0.0
    %540 = vmatprep.subr.mxu0 0.0
    %541 = vmatpush1.xpose.msra.mxu0 0.0
    %542 = vmatprep.subr.mxu0 0.0
    %543 = vmatpush1.xpose.msra.mxu0 0.0
    %544 = vmatprep.subr.mxu0 0.0
    %545 = vmatpush1.xpose.msra.mxu0 0.0
    %546 = vmatprep.subr.mxu0 0.0
    %547 = vmatpush1.xpose.msra.mxu0 0.0
    %548 = vmatprep.subr.mxu0 0.0
    %549 = vmatpush1.xpose.msra.mxu0 0.0
    %550 = vmatprep.subr.mxu0 0.0
    %551 = vmatpush1.xpose.msra.mxu0 0.0
    %552 = vmatprep.subr.mxu0 0.0
    %553 = vmatpush1.xpose.msra.mxu0 0.0
    %554 = vmatprep.subr.mxu0 0.0
    %555 = vmatpush1.xpose.msra.mxu0 0.0
    %556 = vmatprep.subr.mxu0 0.0
    %557 = vmatpush1.xpose.msra.mxu0 0.0
    %558 = vmatprep.subr.mxu0 0.0
    %559 = vmatpush1.xpose.msra.mxu0 0.0
    %560 = vmatprep.subr.mxu0 0.0
    %561 = vmatpush1.xpose.msra.mxu0 0.0
    %562 = vmatprep.subr.mxu0 0.0
    %563 = vmatpush1.xpose.msra.mxu0 0.0
    %564 = vmatprep.subr.mxu0 0.0
    %565 = vmatpush1.xpose.msra.mxu0 0.0
    %566 = vmatprep.subr.mxu0 0.0
    %567 = vmatpush1.xpose.msra.mxu0 0.0
    %568 = vmatprep.subr.mxu0 0.0
    %569 = vmatpush1.xpose.msra.mxu0 0.0
    %570 = vmatprep.subr.mxu0 0.0
    %571 = vmatpush1.xpose.msra.mxu0 0.0
    %572 = vmatprep.subr.mxu0 0.0
    %573 = vmatpush1.xpose.msra.mxu0 0.0
    %574 = vmatprep.subr.mxu0 0.0
    %575 = vmatpush1.xpose.msra.mxu0 0.0
    %576 = vmatprep.subr.mxu0 0.0
    %577 = vmatpush1.xpose.msra.mxu0 0.0
    %578 = vmatprep.subr.mxu0 0.0
    %579 = vmatpush1.xpose.msra.mxu0 0.0
    %580 = vmatprep.subr.mxu0 0.0
    %581 = vmatpush1.xpose.msra.mxu0 0.0
    %582 = vmatprep.subr.mxu0 0.0
    %583 = vmatpush1.xpose.msra.mxu0 0.0
    %584 = vmatprep.subr.mxu0 0.0
    %585 = vmatpush1.xpose.msra.mxu0 0.0
    %586 = vmatprep.subr.mxu0 0.0
    %587 = vmatpush1.xpose.msra.mxu0 0.0
    %588 = vmatprep.subr.mxu0 0.0
    %589 = vmatpush1.xpose.msra.mxu0 0.0
    %590 = vmatprep.subr.mxu0 0.0
    %591 = vmatpush1.xpose.msra.mxu0 0.0
    %592 = vmatprep.subr.mxu0 0.0
    %593 = vmatpush1.xpose.msra.mxu0 0.0
    %594 = vmatprep.mubr.f32.mxu0 0.0
    %595 = vmatmul.mubr.f32.gmra.mrb[0].mxu0 %v525
    %v596 = vpop.f32.mrb[0].mxu0
    %v597 = vadd.f32 0.0, %v596
    %v598 = vpop.f32.mrb[0].mxu0
    %599 = vdwg.mxu0
    %v600 = vmul.f32 %v597, 0.1
    %v601 = vsel %vm283, %v600, -inf
    %602 = vmax.xlane.f32.xlu0 %v601
    %v603 = vpop.xlane.xlu0 %602
    %v604 = vsub.f32 %v600, %v603
    %v605 = vmul.f32 %v604, 1.442695
    %v606 = vpow.pop %v605
    %v607 = vsel %vm283, %v606, 0.0
    %608 = vadd.xlane.f32.xlu0 %v607
    %v609 = vpop.xlane.xlu0 %608
    %v610 = vrcp.pop %v609
    %v611 = vmul.f32 1.0, %v610
    %v612 = vmul.f32 %v611, 1.25
    %s613 = scalar_lea.vmem %s6, 8
    %v614 = vld [vmem:[%s613] sm:$0xff]
    %vm615 = vcmp.ge.u32.totalorder %v614, 858993459
    %v616 = vsel %vm615, %v606, 0.0
    %v617 = vmul.f32 %v616, %v612
    %v619 = vsel %vm283, %v617, 0
    %621 = vmatprep.subr.mxu0 0.0
    %622 = vmatpush1.msra.mxu0 %v521
    %623 = vmatprep.subr.mxu0 0.0
    %624 = vmatpush1.msra.mxu0 0.0
    %625 = vmatprep.subr.mxu0 0.0
    %626 = vmatpush1.msra.mxu0 0.0
    %627 = vmatprep.subr.mxu0 0.0
    %628 = vmatpush1.msra.mxu0 0.0
    %629 = vmatprep.subr.mxu0 0.0
    %630 = vmatpush1.msra.mxu0 0.0
    %631 = vmatprep.subr.mxu0 0.0
    %632 = vmatpush1.msra.mxu0 0.0
    %633 = vmatprep.subr.mxu0 0.0
    %634 = vmatpush1.msra.mxu0 0.0
    %635 = vmatprep.subr.mxu0 0.0
    %636 = vmatpush1.msra.mxu0 0.0
    %637 = vmatprep.subr.mxu0 0.0
    %638 = vmatpush1.msra.mxu0 0.0
    %639 = vmatprep.subr.mxu0 0.0
    %640 = vmatpush1.msra.mxu0 0.0
    %641 = vmatprep.subr.mxu0 0.0
    %642 = vmatpush1.msra.mxu0 0.0
    %643 = vmatprep.subr.mxu0 0.0
    %644 = vmatpush1.msra.mxu0 0.0
    %645 = vmatprep.subr.mxu0 0.0
    %646 = vmatpush1.msra.mxu0 0.0
    %647 = vmatprep.subr.mxu0 0.0
    %648 = vmatpush1.msra.mxu0 0.0
    %649 = vmatprep.subr.mxu0 0.0
    %650 = vmatpush1.msra.mxu0 0.0
    %651 = vmatprep.subr.mxu0 0.0
    %652 = vmatpush1.msra.mxu0 0.0
    %653 = vmatprep.subr.mxu0 0.0
    %654 = vmatpush1.msra.mxu0 0.0
    %655 = vmatprep.subr.mxu0 0.0
    %656 = vmatpush1.msra.mxu0 0.0
    %657 = vmatprep.subr.mxu0 0.0
    %658 = vmatpush1.msra.mxu0 0.0
    %659 = vmatprep.subr.mxu0 0.0
    %660 = vmatpush1.msra.mxu0 0.0
    %661 = vmatprep.subr.mxu0 0.0
    %662 = vmatpush1.msra.mxu0 0.0
    %663 = vmatprep.subr.mxu0 0.0
    %664 = vmatpush1.msra.mxu0 0.0
    %665 = vmatprep.subr.mxu0 0.0
    %666 = vmatpush1.msra.mxu0 0.0
    %667 = vmatprep.subr.mxu0 0.0
    %668 = vmatpush1.msra.mxu0 0.0
    %669 = vmatprep.subr.mxu0 0.0
    %670 = vmatpush1.msra.mxu0 0.0
    %671 = vmatprep.subr.mxu0 0.0
    %672 = vmatpush1.msra.mxu0 0.0
    %673 = vmatprep.subr.mxu0 0.0
    %674 = vmatpush1.msra.mxu0 0.0
    %675 = vmatprep.subr.mxu0 0.0
    %676 = vmatpush1.msra.mxu0 0.0
    %677 = vmatprep.subr.mxu0 0.0
    %678 = vmatpush1.msra.mxu0 0.0
    %679 = vmatprep.subr.mxu0 0.0
    %680 = vmatpush1.msra.mxu0 0.0
    %681 = vmatprep.subr.mxu0 0.0
    %682 = vmatpush1.msra.mxu0 0.0
    %683 = vmatprep.subr.mxu0 0.0
    %684 = vmatpush1.msra.mxu0 0.0
    %685 = vmatprep.mubr.f32.mxu0 0.0
    %686 = vmatmul.mubr.f32.gmra.mrb[0].mxu0 %v619
    %v687 = vpop.f32.mrb[0].mxu0
    %v688 = vadd.f32 0.0, %v687
    %v689 = vpop.f32.mrb[0].mxu0
    %690 = vdwg.mxu0
    %s691 = scalar_lea.vmem [#allocation2], 8
    %692 = vst.msk [vmem:[%s691] sm:$0xff] %vm128, %v688
    // Predicated region
    $region30: #{sdpa_model.1} parent=1 // pred_check
      _
    $region31: #{sdpa_model.1} parent=1 // pred_check_branch
      %694 = sbr.rel (0) target = $region33
    $region32: #{sdpa_model.1} parent=1 // pred_region
      %s696 = ssub.s32 256, 256
      %697 = vsyncadd [#allocation3], %s696
      %s698 = sshll.u32 [#allocation2], 4
      %s699 = int_to_ptr.vmem [resolvable:$true] %s698
      %704 = dma.vmem_to_hbm [thread:$0]  %s699, 256, %s7, [#allocation3], 128, 128, 8
    $region33: #{sdpa_model.1} parent=1 // pred_fallthru
      _
    // Predicated region
    $region34: #{sdpa_model.1} parent=1 // pred_check
      _
    $region35: #{sdpa_model.1} parent=1 // pred_check_branch
      %706 = sbr.rel (0) target = $region37
    $region36: #{sdpa_model.1} parent=1 // pred_region
      %707 = dma.done [#allocation3], 256
    $region37: #{sdpa_model.1} parent=1 // pred_fallthru
      _
    %708 = vsyncpa [#allocation3], 1

</llo_original>
